<compile_context>
chip_gen: v7x
topology: tpu7x:2x2x1
jax: 0.10.0
libtpu: 0.0.40
codegen_flags: <defaults>
</compile_context>

<pallas_src>
import functools

import jax
import jax.numpy as jnp
from jax import lax
from jax.experimental import pallas as pl
from jax.experimental.pallas import tpu as pltpu


def _round_up(v, m):
    return ((v + m - 1) // m) * m


# ----------------------------------------------------------------------------
# Kernel: per-batch min-max scaling + K x K gram accumulation over HW tiles,
# off-diagonal Frobenius norm emitted at the last tile.
# ----------------------------------------------------------------------------
def _orth_reg_kernel(scale_ref, x_ref, o_ref, acc_ref, diag_ref, *,
                     spatial, hw, k_valid):
    b = pl.program_id(0)
    t = pl.program_id(1)

    @pl.when(t == 0)
    def _init():
        acc_ref[...] = jnp.zeros_like(acc_ref)
        if spatial:
            diag_ref[...] = jnp.zeros_like(diag_ref)

    ymin = scale_ref[2 * b]          # per-batch min of selected raw values (SMEM)
    inv = scale_ref[2 * b + 1]       # 1 / (max - min)
    ys = (x_ref[0] - ymin) * inv     # (K, TL), scaled into [0, 1]
    kk, tl = ys.shape

    # Static (trace-time) masking decisions.
    ragged = (hw % tl) != 0          # last HW tile only partially valid
    pad_rows = k_valid < kk          # channel rows padded to a sublane multiple
    if ragged or pad_rows:
        ok = None
        if pad_rows:
            row = lax.broadcasted_iota(jnp.int32, (kk, tl), 0)
            ok = row < k_valid
        if ragged:
            lane = lax.broadcasted_iota(jnp.int32, (kk, tl), 1)
            valid = hw - t * tl      # >= tl for all but the last tile
            lm = lane < valid
            ok = lm if ok is None else (ok & lm)
        ys = jnp.where(ok, ys, 0.0)  # masked columns/rows contribute nothing

    # Partial K x K gram, contracting over this tile's HW columns.  Both
    # operands contract on the lane axis (same pattern as q @ k^T in flash
    # attention) so the MXU consumes it without an extra XLU transpose.
    # Default matmul precision on purpose (see review: HIGHEST flips the
    # kernel MXU-bound on v6e/v7x).
    acc_ref[...] += lax.dot_general(
        ys, ys, (((1,), (1,)), ((), ())),
        preferred_element_type=jnp.float32)

    if spatial:
        # Diagonal of the (never materialized) HW x HW gram: per-spatial-
        # position squared norms.  Lane-wide accumulation; single cross-lane
        # reduce deferred to finalize.
        rn = jnp.sum(ys * ys, axis=0, keepdims=True)        # (1, TL)
        diag_ref[...] += rn * rn

    @pl.when(t == pl.num_programs(1) - 1)
    def _finalize():
        m = acc_ref[...]                                     # (K, K)
        if spatial:
            fro2 = jnp.sum(m * m, keepdims=True)             # ||Y Y^T||_F^2
            d2 = jnp.sum(diag_ref[...], keepdims=True)       # sum_t ||y_t||^4
            off = jnp.maximum(fro2 - d2, 0.0)                # numerical safety
        else:
            # Channel target: gram is the K x K matrix itself; mask the
            # diagonal directly (no catastrophic cancellation).
            row = lax.broadcasted_iota(jnp.int32, m.shape, 0)
            col = lax.broadcasted_iota(jnp.int32, m.shape, 1)
            moff = jnp.where(row == col, 0.0, m)
            off = jnp.sum(moff * moff, keepdims=True)
        o_ref[...] = jnp.sqrt(off)[None]                     # (1, 1, 1)


def _orth_reg(x_sel, scale, *, spatial, tl, num_tiles, hw, k_valid):
    """x_sel: (B, K, HW) f32; scale: (2B,) f32 [min0, inv0, min1, inv1, ...]."""
    B, K, _ = x_sel.shape
    block_bytes = K * tl * 4
    vmem_limit = int(min(48 << 20, max(32 << 20, 8 * block_bytes + (4 << 20))))
    kernel = functools.partial(
        _orth_reg_kernel, spatial=spatial, hw=hw, k_valid=k_valid)
    out = pl.pallas_call(
        kernel,
        out_shape=jax.ShapeDtypeStruct((B, 1, 1), jnp.float32),
        grid=(B, num_tiles),
        in_specs=[
            pl.BlockSpec(memory_space=pltpu.MemorySpace.SMEM),   # scale (2B,) 1-D
            pl.BlockSpec((1, K, tl), lambda b, t: (b, 0, t)),    # x_sel HW tile
        ],
        out_specs=pl.BlockSpec((1, 1, 1), lambda b, t: (b, 0, 0)),
        scratch_shapes=[
            pltpu.VMEM((K, K), jnp.float32),    # gram accumulator
            pltpu.VMEM((1, tl), jnp.float32),   # lane-wide diag accumulator
        ],
        compiler_params=pltpu.CompilerParams(
            dimension_semantics=("parallel", "arbitrary"),
            vmem_limit_bytes=vmem_limit,
        ),
    )(scale, x_sel)
    return out[:, 0, 0]


# ----------------------------------------------------------------------------
# Full forward (matches Orthogonality.forward).
# ----------------------------------------------------------------------------
@functools.partial(jax.jit, static_argnames=("target", "sort_by", "k"))
def orthogonality_forward(x, *, target="spatial", sort_by="mean", k=128):
    if target not in ("spatial", "channel"):
        raise ValueError(target)
    if sort_by not in ("mean", "max"):
        raise ValueError(sort_by)
    spatial = target == "spatial"

    B, C, H, W = x.shape
    HW = H * W
    xf = x.reshape(B, C, HW).astype(jnp.float32)
    k_eff = min(k, C)

    if k_eff < C:
        # One fused pass over xf (XLA multi-output reduction fusion): ranking
        # score + per-channel min/max for the second scaling's scalars.
        ch_min = xf.min(axis=-1)                                 # (B, C)
        ch_max = xf.max(axis=-1)                                 # (B, C)
        score = xf.mean(axis=-1) if sort_by == "mean" else ch_max
        idx = jnp.argsort(-score, axis=-1)[:, :k_eff]            # descending
        ymin = jnp.take_along_axis(ch_min, idx, axis=1).min(axis=1)   # (B,)
        ymax = jnp.take_along_axis(ch_max, idx, axis=1).max(axis=1)   # (B,)
        # Pad channel count to a sublane multiple (8) by duplicating the top
        # index; duplicated rows are zero-masked inside the kernel.
        K = _round_up(k_eff, 8)
        if K > k_eff:
            idx = jnp.concatenate(
                [idx, jnp.broadcast_to(idx[:, :1], (B, K - k_eff))], axis=1)
        # TODO(synk): gather the selected rows in-kernel (scalar-prefetched idx
        # + per-row DMA from a pl.ANY HBM ref) to drop this HBM round trip.
        x_sel = jnp.take_along_axis(xf, idx[:, :, None], axis=1)     # (B, K, HW)
        k_valid = k_eff
    else:
        # All channels selected: regularizer is channel-permutation invariant,
        # so skip scoring/argsort/gather entirely; min/max over raw x.
        ymin = xf.min(axis=(1, 2))
        ymax = xf.max(axis=(1, 2))
        x_sel = xf
        K = C
        k_valid = C

    # Per-batch scaling scalars, flattened 1-D for compact SMEM layout:
    # scale[2b] = min, scale[2b+1] = 1/(max-min). (Constant inputs give
    # inf/NaN, identical to the PyTorch reference.)
    scale = jnp.stack([ymin, 1.0 / (ymax - ymin)], axis=-1).reshape(-1)
    scale = scale.astype(jnp.float32)

    # HW tiling: ~4 MiB per input block; no padding copy of x_sel (a ragged
    # last tile is masked in-kernel with a lane iota).
    tl_target = ((4 << 20) // (K * 4) // 128) * 128
    tl_target = max(512, min(16384, tl_target))
    if HW <= tl_target:
        tl = HW                               # single full-extent tile
        num_tiles = 1
    else:
        tl = min(tl_target, (HW // 128) * 128)
        num_tiles = pl.cdiv(HW, tl)

    # TODO(synk): for B == 1 on v7x, split HW into two parallel halves (partial
    # grams summed in glue) so both TensorCores have work.
    return _orth_reg(x_sel, scale, spatial=spatial, tl=tl,
                     num_tiles=num_tiles, hw=HW, k_valid=k_valid)


# ----------------------------------------------------------------------------
# Pure-JAX reference (mirrors the PyTorch code) for correctness checks.
# ----------------------------------------------------------------------------
def reference_forward(x, target="spatial", sort_by="mean", k=128):
    B, C, H, W = x.shape
    xf = x.reshape(B, C, H * W)
    xmin = xf.min(axis=(1, 2), keepdims=True)
    xmax = xf.max(axis=(1, 2), keepdims=True)
    xs = (xf - xmin) / (xmax - xmin)
    score = xs.mean(-1) if sort_by == "mean" else xs.max(-1)
    idx = jnp.argsort(-score, axis=-1)[:, : min(k, C)]
    x_sel = jnp.take_along_axis(xs, idx[:, :, None], axis=1)
    y = jnp.swapaxes(x_sel, 1, 2) if target == "spatial" else x_sel
    ymin = y.min(axis=(1, 2), keepdims=True)
    ymax = y.max(axis=(1, 2), keepdims=True)
    ys = (y - ymin) / (ymax - ymin)
    g = ys @ jnp.swapaxes(ys, 1, 2)
    n = g.shape[-1]
    g = g * (1.0 - jnp.eye(n, dtype=g.dtype))
    return jnp.sqrt(jnp.sum(g * g, axis=(1, 2)))


if __name__ == "__main__":
    key = jax.random.PRNGKey(0)
    x = jax.random.normal(key, (2, 4, 16, 16), dtype=jnp.float32)

    # Default path (spatial / mean / k=128 -> all C=4 channels kept).
    reg = jax.block_until_ready(orthogonality_forward(x))
    ref = reference_forward(x)
    assert reg.shape == (2,), reg.shape
    assert jnp.allclose(reg, ref, rtol=2e-3, atol=2e-3), (reg, ref)

    # Selection active (k < C): spatial target, row-mask / padded-K path.
    reg2 = jax.block_until_ready(
        orthogonality_forward(x, target="spatial", sort_by="mean", k=3))
    ref2 = reference_forward(x, target="spatial", sort_by="mean", k=3)
    assert jnp.allclose(reg2, ref2, rtol=2e-3, atol=2e-3), (reg2, ref2)

    # Channel target with selection (direct diagonal masking at finalize).
    reg3 = jax.block_until_ready(
        orthogonality_forward(x, target="channel", sort_by="max", k=2))
    ref3 = reference_forward(x, target="channel", sort_by="max", k=2)
    assert jnp.allclose(reg3, ref3, rtol=2e-3, atol=2e-3), (reg3, ref3)

    print("KERNEL_OK")
</pallas_src>

<mosaic_0001>
module attributes {stable_mosaic.version = 11 : i64} {
  func.func @_orth_reg_kernel(%arg0: i32, %arg1: i32, %arg2: memref<4xf32, #tpu.memory_space<smem>>, %arg3: memref<1x4x256xf32, #tpu.memory_space<vmem>>, %arg4: memref<1x1x1xf32, #tpu.memory_space<vmem>>, %arg5: memref<4x4xf32, #tpu.memory_space<vmem>>, %arg6: memref<1x256xf32, #tpu.memory_space<vmem>>) attributes {dimension_semantics = [#tpu.dimension_semantics<parallel>, #tpu.dimension_semantics<arbitrary>], iteration_bounds = array<i64: 2, 1>, scalar_prefetch = 0 : i64, scratch_operands = 2 : i64, tpu.core_type = #tpu.core_type<tc>, window_params = [{transform_indices = @transform_0, window_bounds = array<i64: 4>}, {transform_indices = @transform_1, window_bounds = array<i64: 1, 4, 256>}, {transform_indices = @transform_2, window_bounds = array<i64: 1, 1, 1>}]} {
    %c0_i32 = arith.constant 0 : i32
    %0 = arith.cmpi eq, %arg1, %c0_i32 : i32
    %1 = arith.extui %0 : i1 to i32
    %c0_i32_0 = arith.constant 0 : i32
    %2 = arith.cmpi ne, %1, %c0_i32_0 : i32
    scf.if %2 {
      %cst_15 = arith.constant 0.000000e+00 : f32
      %30 = vector.broadcast %cst_15 : f32 to vector<4x4xf32>
      %c0_16 = arith.constant 0 : index
      %c0_17 = arith.constant 0 : index
      %31 = vector.load %arg5[%c0_16, %c0_17] : memref<4x4xf32, #tpu.memory_space<vmem>>, vector<4x4xf32>
      tpu.vector_store %arg5[%c0_16, %c0_17], %30 {strides = array<i32>} : memref<4x4xf32, #tpu.memory_space<vmem>>, vector<4x4xf32>,
      %cst_18 = arith.constant 0.000000e+00 : f32
      %32 = vector.broadcast %cst_18 : f32 to vector<1x256xf32>
      %c0_19 = arith.constant 0 : index
      %c0_20 = arith.constant 0 : index
      %33 = vector.load %arg6[%c0_19, %c0_20] : memref<1x256xf32, #tpu.memory_space<vmem>>, vector<1x256xf32>
      tpu.vector_store %arg6[%c0_19, %c0_20], %32 {strides = array<i32>} : memref<1x256xf32, #tpu.memory_space<vmem>>, vector<1x256xf32>,
    } else {
    }
    %c2_i32 = arith.constant 2 : i32
    %3 = arith.muli %c2_i32, %arg0 : i32
    %4 = arith.index_cast %3 : i32 to index
    %5 = memref.load %arg2[%4] : memref<4xf32, #tpu.memory_space<smem>>
    %c2_i32_1 = arith.constant 2 : i32
    %6 = arith.muli %c2_i32_1, %arg0 : i32
    %c1_i32 = arith.constant 1 : i32
    %7 = arith.addi %6, %c1_i32 : i32
    %8 = arith.index_cast %7 : i32 to index
    %9 = memref.load %arg2[%8] : memref<4xf32, #tpu.memory_space<smem>>
    %c0 = arith.constant 0 : index
    %c0_2 = arith.constant 0 : index
    %c0_3 = arith.constant 0 : index
    %10 = vector.load %arg3[%c0, %c0_2, %c0_3] : memref<1x4x256xf32, #tpu.memory_space<vmem>>, vector<1x4x256xf32>
    %11 = vector.shape_cast %10 : vector<1x4x256xf32> to vector<4x256xf32>
    %12 = vector.broadcast %5 : f32 to vector<4x256xf32>
    %13 = arith.subf %11, %12 : vector<4x256xf32>
    %14 = vector.broadcast %9 : f32 to vector<4x256xf32>
    %15 = arith.mulf %13, %14 : vector<4x256xf32>
    %c0_4 = arith.constant 0 : index
    %c0_5 = arith.constant 0 : index
    %16 = vector.load %arg5[%c0_4, %c0_5] : memref<4x4xf32, #tpu.memory_space<vmem>>, vector<4x4xf32>
    %cst = arith.constant dense<0.000000e+00> : vector<4x4xf32>
    %17 = tpu.matmul %15, %15, %cst {dimension_numbers = #tpu.dot_dimension_numbers<[1], [1], [0], [0], [0, 0, 1, 0], [], []>} : vector<4x256xf32>, vector<4x256xf32>, vector<4x4xf32> -> vector<4x4xf32>
    %18 = arith.addf %16, %17 : vector<4x4xf32>
    %c0_6 = arith.constant 0 : index
    %c0_7 = arith.constant 0 : index
    %19 = vector.load %arg5[%c0_6, %c0_7] : memref<4x4xf32, #tpu.memory_space<vmem>>, vector<4x4xf32>
    tpu.vector_store %arg5[%c0_6, %c0_7], %18 {strides = array<i32>} : memref<4x4xf32, #tpu.memory_space<vmem>>, vector<4x4xf32>,
    %20 = arith.mulf %15, %15 : vector<4x256xf32>
    %cst_8 = arith.constant dense<0.000000e+00> : vector<256xf32>
    %21 = vector.multi_reduction <add>, %20, %cst_8 [0] : vector<4x256xf32> to vector<256xf32>
    %22 = vector.shape_cast %21 : vector<256xf32> to vector<1x256xf32>
    %c0_9 = arith.constant 0 : index
    %c0_10 = arith.constant 0 : index
    %23 = vector.load %arg6[%c0_9, %c0_10] : memref<1x256xf32, #tpu.memory_space<vmem>>, vector<1x256xf32>
    %24 = arith.mulf %22, %22 : vector<1x256xf32>
    %25 = arith.addf %23, %24 : vector<1x256xf32>
    %c0_11 = arith.constant 0 : index
    %c0_12 = arith.constant 0 : index
    %26 = vector.load %arg6[%c0_11, %c0_12] : memref<1x256xf32, #tpu.memory_space<vmem>>, vector<1x256xf32>
    tpu.vector_store %arg6[%c0_11, %c0_12], %25 {strides = array<i32>} : memref<1x256xf32, #tpu.memory_space<vmem>>, vector<1x256xf32>,
    %c0_i32_13 = arith.constant 0 : i32
    %27 = arith.cmpi eq, %arg1, %c0_i32_13 : i32
    %28 = arith.extui %27 : i1 to i32
    %c0_i32_14 = arith.constant 0 : i32
    %29 = arith.cmpi ne, %28, %c0_i32_14 : i32
    scf.if %29 {
      %c0_15 = arith.constant 0 : index
      %c0_16 = arith.constant 0 : index
      %30 = vector.load %arg5[%c0_15, %c0_16] : memref<4x4xf32, #tpu.memory_space<vmem>>, vector<4x4xf32>
      %31 = arith.mulf %30, %30 : vector<4x4xf32>
      %32 = vector.shape_cast %31 : vector<4x4xf32> to vector<1x4x4xf32>
      %cst_17 = arith.constant dense<0.000000e+00> : vector<1xf32>
      %33 = vector.multi_reduction <add>, %32, %cst_17 [1, 2] : vector<1x4x4xf32> to vector<1xf32>
      %34 = vector.shape_cast %33 : vector<1xf32> to vector<1x1x1xf32>
      %35 = vector.extract %34[0, 0, 0] : f32 from vector<1x1x1xf32>
      %36 = vector.broadcast %35 : f32 to vector<1x1xf32>
      %c0_18 = arith.constant 0 : index
      %c0_19 = arith.constant 0 : index
      %37 = vector.load %arg6[%c0_18, %c0_19] : memref<1x256xf32, #tpu.memory_space<vmem>>, vector<1x256xf32>
      %38 = vector.shape_cast %37 : vector<1x256xf32> to vector<1x1x256xf32>
      %cst_20 = arith.constant dense<0.000000e+00> : vector<1xf32>
      %39 = vector.multi_reduction <add>, %38, %cst_20 [1, 2] : vector<1x1x256xf32> to vector<1xf32>
      %40 = vector.shape_cast %39 : vector<1xf32> to vector<1x1x1xf32>
      %41 = vector.extract %40[0, 0, 0] : f32 from vector<1x1x1xf32>
      %42 = vector.broadcast %41 : f32 to vector<1x1xf32>
      %43 = arith.subf %36, %42 : vector<1x1xf32>
      %cst_21 = arith.constant 0.000000e+00 : f32
      %44 = vector.broadcast %cst_21 : f32 to vector<1x1xf32>
      %45 = arith.maximumf %43, %44 : vector<1x1xf32>
      %46 = math.sqrt %45 : vector<1x1xf32>
      %47 = vector.shape_cast %46 : vector<1x1xf32> to vector<1x1x1xf32>
      %c0_22 = arith.constant 0 : index
      %c0_23 = arith.constant 0 : index
      %c0_24 = arith.constant 0 : index
      %48 = vector.load %arg4[%c0_22, %c0_23, %c0_24] : memref<1x1x1xf32, #tpu.memory_space<vmem>>, vector<1x1x1xf32>
      tpu.vector_store %arg4[%c0_22, %c0_23, %c0_24], %47 {strides = array<i32>} : memref<1x1x1xf32, #tpu.memory_space<vmem>>, vector<1x1x1xf32>,
    } else {
    }
    return
  }
  func.func @transform_0(%arg0: i32, %arg1: i32) -> i32 {
    %c0_i32 = arith.constant 0 : i32
    %c0_i32_0 = arith.constant 0 : i32
    return %c0_i32 : i32
  }
  func.func @transform_1(%arg0: i32, %arg1: i32) -> (i32, i32, i32) {
    %c0_i32 = arith.constant 0 : i32
    %c0_i32_0 = arith.constant 0 : i32
    return %arg0, %c0_i32, %arg1 : i32, i32, i32
  }
  func.func @transform_2(%arg0: i32, %arg1: i32) -> (i32, i32, i32) {
    %c0_i32 = arith.constant 0 : i32
    %c0_i32_0 = arith.constant 0 : i32
    %c0_i32_1 = arith.constant 0 : i32
    return %arg0, %c0_i32, %c0_i32_0 : i32, i32, i32
  }
}

</mosaic_0001>

<llo_original>
// kernel: orthogonality_forward.1
$region0: #{orthogonality_forward.1}
  #allocation0 [shape = 'u32[]', space=smem, size = 0x4, offset = 0x4, fixed_abs, tag = 'smem constant byte address 0x4 - core index']
  #allocation1 [shape = 'u32[144,128]{1,0:T(1,128)}', space=vmem, size = 0x12000, scoped, tag = 'internal scratch']
  #allocation2 [shape = 'f32[4,4]{1,0:T(4,128)}', space=vmem, size = 0x800, scoped, tag = 'scratch operand']
  #allocation3 [shape = 'f32[1,256]{1,0:T(1,128)}', space=vmem, size = 0x400, scoped, tag = 'scratch operand']
  %s0 = inlined_call_operand.vmem [shape: f32[4], index: 0, kind: input, shape index: {}]
  %s1 = inlined_call_operand.vmem [shape: f32[2,4,256], index: 1, kind: input, shape index: {}]
  %s2 = inlined_call_operand.vmem [shape: f32[2,1,1], index: 2, kind: output, shape index: {}]
  %s3 = sld [smem:[#allocation0]]
  $region53: #{orthogonality_forward.1} parent=0
    _
  %s5 = ssub.s32 1, %s3
  %s6 = scalar_select 0, %s5, %s3
  $region1: #{orthogonality_forward.1} parent=0
    #allocation4 [shape = 'u8[512]{0}', space=smem, size = 0x200, scoped, tag = 'input window, operand 0, single buffered']
    #allocation5 [shape = 's32[2]{0}', space=sflag, size = 0x8, scoped, tag = 'scoped memory for orthogonality_forward.1']
    %7 = vsyncpa [#allocation5], 0
    loop: start=0, step=1, limit=4
    $region2: #{orthogonality_forward.1} parent=1 // loop_pre_header
      _
    $region3: #{orthogonality_forward.1} parent=1 // loop_header
      %s9 = sphi 0, %s13
      %p10 = scmp.ge.s32.totalorder %s9, 4
      %s16 = sphi 0, %s28
      %s17 = sphi 0, %s24
      %s18 = sphi 0, %s16
      %s19 = sphi 0, %s17
      %s20 = sphi 0, %s18
      %s21 = sphi 0, %s19
      %s29 = sphi 0, %s29
      %s31 = sphi 0, %s29
      %s32 = sphi 0, %s31
      %s46 = sphi 0, %s32
      %s54 = sphi 0, %s56
      %s57 = sphi 0, %s54
      %s58 = sphi 0, %s57
      %s74 = sphi 0, %s58
      %s80 = sphi 0, %s82
      %s83 = sphi 0, %s80
      %s84 = sphi 0, %s83
      %s100 = sphi 0, %s84
    $region4: #{orthogonality_forward.1} parent=1 // loop_header_branch
      %12 = sbr.rel (%p10) target = $region8
    $region5: #{orthogonality_forward.1} parent=1 // loop_body
      %s14 = ssub.s32 %s9, 1
      %s15 = ssub.s32 %s9, 2
      %s22 = sadd.s32 1, %s17
      %p23 = scmp.ge.s32.totalorder %s22, 1
      %s24 = scalar_select %p23, 0, %s22
      %s25 = sadd.s32 1, %s16
      %s26 = scalar_select %p23, %s25, %s16
      %p27 = scmp.ge.s32.totalorder %s26, 2
      %s28 = scalar_select %p27, 0, %s26
      %s30 = sadd.s32 %s29, 1
      %p33 = scmp.eq.s32.totalorder %s9, 1
      %p34 = scmp.ne.s32.totalorder %s29, %s31
      %p35 = scmp.eq.s32.totalorder %s9, 0
      %p36 = por %p34, %p35
      %p37 = scmp.ne.s32.totalorder %s29, %s31
      %p38 = scmp.eq.s32.totalorder %s14, 1
      %p39 = por %p37, %p38
      %p40 = scmp.ne.s32.totalorder %s31, %s32
      %p41 = scmp.eq.s32.totalorder %s14, 0
      %p42 = por %p40, %p41
      %p43 = scmp.ne.s32.totalorder %s31, %s32
      %p44 = scmp.eq.s32.totalorder %s15, 1
      %p45 = por %p43, %p44
      %p47 = scmp.ne.s32.totalorder %s32, %s46
      %p48 = scmp.eq.s32.totalorder %s15, 0
      %p49 = por %p47, %p48
      %s50 = ssub.s32 %s16, %s28
      %s51 = ssub.s32 %s17, %s24
      %s52 = sor.u32 %s50, %s51
      %p53 = scmp.eq.s32.totalorder %s52, 0
      %s55 = sadd.s32 %s54, 1
      %s56 = scalar_select %p53, %s54, %s55
      %p59 = pneg %p53
      %p60 = scmp.eq.s32.totalorder %s9, 1
      %p61 = por %p59, %p60
      %p62 = scmp.ne.s32.totalorder %s54, %s57
      %p63 = scmp.eq.s32.totalorder %s9, 0
      %p64 = por %p62, %p63
      %p65 = scmp.ne.s32.totalorder %s54, %s57
      %p66 = scmp.eq.s32.totalorder %s14, 1
      %p67 = por %p65, %p66
      %p68 = scmp.ne.s32.totalorder %s57, %s58
      %p69 = scmp.eq.s32.totalorder %s14, 0
      %p70 = por %p68, %p69
      %p71 = scmp.ne.s32.totalorder %s57, %s58
      %p72 = scmp.eq.s32.totalorder %s15, 1
      %p73 = por %p71, %p72
      %p75 = scmp.ne.s32.totalorder %s58, %s74
      %p76 = scmp.eq.s32.totalorder %s15, 0
      %p77 = por %p75, %p76
      %s78 = ssub.s32 %s16, %s28
      %p79 = scmp.eq.s32.totalorder %s78, 0
      %s81 = sadd.s32 %s80, 1
      %s82 = scalar_select %p79, %s80, %s81
      %p85 = pneg %p79
      %p86 = scmp.eq.s32.totalorder %s9, 1
      %p87 = por %p85, %p86
      %p88 = scmp.ne.s32.totalorder %s80, %s83
      %p89 = scmp.eq.s32.totalorder %s9, 0
      %p90 = por %p88, %p89
      %p91 = scmp.ne.s32.totalorder %s80, %s83
      %p92 = scmp.eq.s32.totalorder %s14, 1
      %p93 = por %p91, %p92
      %p94 = scmp.ne.s32.totalorder %s83, %s84
      %p95 = scmp.eq.s32.totalorder %s14, 0
      %p96 = por %p94, %p95
      %p97 = scmp.ne.s32.totalorder %s83, %s84
      %p98 = scmp.eq.s32.totalorder %s15, 1
      %p99 = por %p97, %p98
      %p101 = scmp.ne.s32.totalorder %s84, %s100
      %p102 = scmp.eq.s32.totalorder %s15, 0
      %p103 = por %p101, %p102
      %p104 = scmp.le.s32.totalorder 1, %s9
      %p105 = scmp.lt.s32.totalorder %s9, 3
      %p106 = pnand %p104, %p105
      %p107 = pneg %p106
      // Predicated region
      $region9: #{orthogonality_forward.1} parent=5 // pred_check
        _
      $region10: #{orthogonality_forward.1} parent=5 // pred_check_branch
        %109 = sbr.rel (%p106) target = $region12
      $region11: #{orthogonality_forward.1} parent=5 // pred_region
        %s110 = ssub.s32 %s9, 1
        // Predicated region
        $region13: #{orthogonality_forward.1} parent=11 // pred_check
          %p111 = pneg %p42
        $region14: #{orthogonality_forward.1} parent=11 // pred_check_branch
          %113 = sbr.rel (%p111) target = $region16
        $region15: #{orthogonality_forward.1} parent=11 // pred_region
          %s115 = ssub.s32 16, 16
          %116 = vsyncadd [#allocation5], %s115
          %s118 = sshll.u32 %s0, 4
          %s119 = int_to_ptr.vmem [resolvable:$true] %s118
          %121 = dma.vmem_to_smem %s119, 16, [#allocation4], [#allocation5]
        $region16: #{orthogonality_forward.1} parent=11 // pred_fallthru
          _
      $region12: #{orthogonality_forward.1} parent=5 // pred_fallthru
        _
      %p122 = scmp.lt.s32.totalorder %s9, 2
      // Predicated region
      $region17: #{orthogonality_forward.1} parent=5 // pred_check
        %p123 = pneg %p122
      $region18: #{orthogonality_forward.1} parent=5 // pred_check_branch
        %125 = sbr.rel (%p123) target = $region20
      $region19: #{orthogonality_forward.1} parent=5 // pred_region
        // Predicated region
        $region21: #{orthogonality_forward.1} parent=19 // pred_check
          %p126 = pneg %p64
        $region22: #{orthogonality_forward.1} parent=19 // pred_check_branch
          %128 = sbr.rel (%p126) target = $region24
        $region23: #{orthogonality_forward.1} parent=19 // pred_region
          %s129 = smul.u32 2, %s17
          %p130 = scmp.lt.s32.totalorder %s16, 1
          %s131 = scalar_select %p130, %s16, 1
          %p132 = scmp.lt.s32.totalorder %s129, 1
          %s133 = scalar_select %p132, %s129, 1
          %s134 = smul.addr %s131, 2
          %s135 = sadd.s32 %s133, %s134
          %s136 = smul.addr %s135, 4
          %s137 = scalar_lea.vmem %s1, %s136
          %s138 = smul.u32 2, %s17
        $region24: #{orthogonality_forward.1} parent=19 // pred_fallthru
          _
      $region20: #{orthogonality_forward.1} parent=5 // pred_fallthru
        _
      %p139 = scmp.le.s32.totalorder 1, %s9
      %p140 = scmp.lt.s32.totalorder %s9, 3
      %p141 = pnand %p139, %p140
      %p142 = pneg %p141
      // Predicated region
      $region25: #{orthogonality_forward.1} parent=5 // pred_check
        _
      $region26: #{orthogonality_forward.1} parent=5 // pred_check_branch
        %144 = sbr.rel (%p141) target = $region28
      $region27: #{orthogonality_forward.1} parent=5 // pred_region
        %s145 = ssub.s32 %s9, 1
        // Predicated region
        $region29: #{orthogonality_forward.1} parent=27 // pred_check
          %p146 = pneg %p42
        $region30: #{orthogonality_forward.1} parent=27 // pred_check_branch
          %148 = sbr.rel (%p146) target = $region32
        $region31: #{orthogonality_forward.1} parent=27 // pred_region
          %149 = dma.done [#allocation5], 16
        $region32: #{orthogonality_forward.1} parent=27 // pred_fallthru
          _
        %150 = sfence
        %p151 = pneg %p42
        %p152 = pneg %p39
        %s153 = smul.u32 2, %s19
        %p154 = scmp.lt.s32.totalorder %s18, 1
        %s155 = scalar_select %p154, %s18, 1
        %p156 = scmp.lt.s32.totalorder %s153, 1
        %s157 = scalar_select %p156, %s153, 1
        %s158 = smul.addr %s155, 2
        %s159 = sadd.s32 %s157, %s158
        %s160 = smul.addr %s159, 4
        %s161 = scalar_lea.vmem %s1, %s160
        %p162 = pneg %p70
        %p163 = pneg %p67
        %p164 = pneg %p96
        %p165 = pneg %p93
        %p166 = scmp.lt.s32.totalorder %s18, 1
        %s167 = scalar_select %p166, %s18, 1
        %s168 = scalar_lea.vmem %s2, %s167
        %s169 = smul.u32 2, %s19
        %p170 = scmp.lt.s32.totalorder %s18, 1
        %s171 = scalar_select %p170, %s18, 1
        %p172 = scmp.lt.s32.totalorder %s169, 1
        %s173 = scalar_select %p172, %s169, 1
        %s174 = smul.addr %s171, 2
        %s175 = sadd.s32 %s173, %s174
        %s176 = smul.addr %s175, 4
        %s177 = scalar_lea.vmem %s1, %s176
        %s178 = smul.u32 2, %s19
        %p179 = scmp.lt.s32.totalorder %s18, 1
        %s180 = scalar_select %p179, %s18, 1
        %s181 = scalar_lea.vmem %s2, %s180
        %p182 = scmp.eq.s32.totalorder %s19, 0
        // Predicated region
        $region33: #{orthogonality_forward.1} parent=27 // pred_check
          %p183 = pneg %p182
        $region34: #{orthogonality_forward.1} parent=27 // pred_check_branch
          %185 = sbr.rel (%p183) target = $region36
        $region35: #{orthogonality_forward.1} parent=27 // pred_region
          %vm186 = vcmask 27648
          %187 = vst.msk [vmem:[#allocation2] sm:$0xf] %vm186, 0.0
          %v188 = vlaneseq
          %vm189 = vcmp.ge.s32.totalorder %v188, 0
          %vm190 = vcmp.lt.s32.totalorder %v188, 256
          %vm191 = vmand %vm189, %vm190
          %192 = vst.msk [vmem:[#allocation3] sm:$0x3] %vm191, 0.0
        $region36: #{orthogonality_forward.1} parent=27 // pred_fallthru
          _
        %s193 = smul.u32 %s18, 2
        %s194 = sld [smem:[#allocation4 + %s193]]
        %s195 = sadd.s32 %s193, 1
        %s196 = sld [smem:[#allocation4 + %s195]]
        %v197 = vld [vmem:[%s177] sm:$0xff]
        %v198 = vstv %s194
        %v199 = vsub.f32 %v197, %v198
        %v200 = vstv %s196
        %v201 = vmul.f32 %v199, %v200
        %v202 = vld [vmem:[#allocation2] sm:$0xf]
        %v204 = vcombine.high %v201, %v201
        %206 = vmatprep.subr.mxu0 %v204
        %207 = vmatpush1.xpose.msra.mxu0 %v201
        %208 = vmatprep.subr.mxu0 0.0
        %209 = vmatpush1.xpose.msra.mxu0 0.0
        %210 = vmatprep.subr.mxu0 0.0
        %211 = vmatpush1.xpose.msra.mxu0 0.0
        %212 = vmatprep.subr.mxu0 0.0
        %213 = vmatpush1.xpose.msra.mxu0 0.0
        %214 = vmatprep.subr.mxu0 0.0
        %215 = vmatpush1.xpose.msra.mxu0 0.0
        %216 = vmatprep.subr.mxu0 0.0
        %217 = vmatpush1.xpose.msra.mxu0 0.0
        %218 = vmatprep.subr.mxu0 0.0
        %219 = vmatpush1.xpose.msra.mxu0 0.0
        %220 = vmatprep.subr.mxu0 0.0
        %221 = vmatpush1.xpose.msra.mxu0 0.0
        %222 = vmatprep.subr.mxu0 0.0
        %223 = vmatpush1.xpose.msra.mxu0 0.0
        %224 = vmatprep.subr.mxu0 0.0
        %225 = vmatpush1.xpose.msra.mxu0 0.0
        %226 = vmatprep.subr.mxu0 0.0
        %227 = vmatpush1.xpose.msra.mxu0 0.0
        %228 = vmatprep.subr.mxu0 0.0
        %229 = vmatpush1.xpose.msra.mxu0 0.0
        %230 = vmatprep.subr.mxu0 0.0
        %231 = vmatpush1.xpose.msra.mxu0 0.0
        %232 = vmatprep.subr.mxu0 0.0
        %233 = vmatpush1.xpose.msra.mxu0 0.0
        %234 = vmatprep.subr.mxu0 0.0
        %235 = vmatpush1.xpose.msra.mxu0 0.0
        %236 = vmatprep.subr.mxu0 0.0
        %237 = vmatpush1.xpose.msra.mxu0 0.0
        %238 = vmatprep.subr.mxu0 0.0
        %239 = vmatpush1.xpose.msra.mxu0 0.0
        %240 = vmatprep.subr.mxu0 0.0
        %241 = vmatpush1.xpose.msra.mxu0 0.0
        %242 = vmatprep.subr.mxu0 0.0
        %243 = vmatpush1.xpose.msra.mxu0 0.0
        %244 = vmatprep.subr.mxu0 0.0
        %245 = vmatpush1.xpose.msra.mxu0 0.0
        %246 = vmatprep.subr.mxu0 0.0
        %247 = vmatpush1.xpose.msra.mxu0 0.0
        %248 = vmatprep.subr.mxu0 0.0
        %249 = vmatpush1.xpose.msra.mxu0 0.0
        %250 = vmatprep.subr.mxu0 0.0
        %251 = vmatpush1.xpose.msra.mxu0 0.0
        %252 = vmatprep.subr.mxu0 0.0
        %253 = vmatpush1.xpose.msra.mxu0 0.0
        %254 = vmatprep.subr.mxu0 0.0
        %255 = vmatpush1.xpose.msra.mxu0 0.0
        %256 = vmatprep.subr.mxu0 0.0
        %257 = vmatpush1.xpose.msra.mxu0 0.0
        %258 = vmatprep.subr.mxu0 0.0
        %259 = vmatpush1.xpose.msra.mxu0 0.0
        %260 = vmatprep.subr.mxu0 0.0
        %261 = vmatpush1.xpose.msra.mxu0 0.0
        %262 = vmatprep.subr.mxu0 0.0
        %263 = vmatpush1.xpose.msra.mxu0 0.0
        %264 = vmatprep.subr.mxu0 0.0
        %265 = vmatpush1.xpose.msra.mxu0 0.0
        %266 = vmatprep.subr.mxu0 0.0
        %267 = vmatpush1.xpose.msra.mxu0 0.0
        %268 = vmatprep.subr.mxu0 0.0
        %269 = vmatpush1.xpose.msra.mxu0 0.0
        %270 = vmatprep.mubr.f32.mxu0 %v204
        %271 = vmatmul.mubr.f32.gmra.mrb[0].mxu0 %v201
        %v272 = vpop.f32.mrb[0].mxu0
        %v273 = vadd.f32 0.0, %v272
        %v274 = vpop.f32.mrb[0].mxu0
        %275 = vdwg.mxu0
        %v276 = vadd.f32 %v202, %v273
        %vm277 = vcmask 27648
        %278 = vst.msk [vmem:[#allocation2] sm:$0xf] %vm277, %v276
        %v279 = vmul.f32 %v201, %v201
        %v281 = vcombine.high %v279, %v279
        %vm283 = vcmask 1043456
        %v284 = vsel %vm283, %v279, 0.0
        %v285 = vrot.slane %v284, 4
        %v286 = vadd.f32 %v284, %v285
        %v287 = vrot.slane %v286, 2
        %v288 = vadd.f32 %v286, %v287
        %v289 = vrot.slane %v288, 1
        %v290 = vadd.f32 %v288, %v289
        %v291 = vsel %vm283, %v281, 0.0
        %v292 = vrot.slane %v291, 4
        %v293 = vadd.f32 %v291, %v292
        %v294 = vrot.slane %v293, 2
        %v295 = vadd.f32 %v293, %v294
        %v296 = vrot.slane %v295, 1
        %v297 = vadd.f32 %v295, %v296
        %v298 = vld [vmem:[#allocation3] sm:$0x3]
        %v299 = vmul.f32 %v290, %v290
        %v300 = vmul.f32 %v297, %v297
        %v303 = vcombine.low %v299, %v300
        %v305 = vunpack.c.l.s4 1966171168
        %v306 = vunpack.c.0.s8 %v305
        %v307 = vlaneseq
        %v308 = vshrl.u32 %v307, 7
        %v309 = vsub.s32 %v306, %v308
        %v310 = vrot.slane %v303, %v309
        %v312 = vunpack.c.l.s4 1966171168
        %v313 = vunpack.c.0.s8 %v312
        %v314 = vlaneseq
        %v315 = vshrl.u32 %v314, 7
        %v316 = vsub.s32 %v313, %v315
        %v317 = vrot.slane %v310, %v316
        %v319 = vadd.f32 %v298, %v317
        %v320 = vlaneseq
        %vm321 = vcmp.ge.s32.totalorder %v320, 0
        %vm322 = vcmp.lt.s32.totalorder %v320, 256
        %vm323 = vmand %vm321, %vm322
        %324 = vst.msk [vmem:[#allocation3] sm:$0x3] %vm323, %v319
        // Predicated region
        $region37: #{orthogonality_forward.1} parent=27 // pred_check
          %p325 = pneg %p182
        $region38: #{orthogonality_forward.1} parent=27 // pred_check_branch
          %327 = sbr.rel (%p325) target = $region40
        $region39: #{orthogonality_forward.1} parent=27 // pred_region
          %v328 = vld [vmem:[#allocation2] sm:$0xf]
          %v329 = vmul.f32 %v328, %v328
          %v330 = vsel %vm277, %v329, 0.0
          %331 = vadd.xlane.f32.xlu0 %v330
          %v332 = vpop.xlane.xlu0 %331
          %v333 = vrot.slane %v332, 4
          %v334 = vadd.f32 %v332, %v333
          %v335 = vrot.slane %v334, 2
          %v336 = vadd.f32 %v334, %v335
          %v337 = vrot.slane %v336, 1
          %v338 = vadd.f32 %v336, %v337
          %s339 = vtos %v338
          %v340 = vstv %s339
          %v341 = vld [vmem:[#allocation3] sm:$0x3]
          %v343 = vlaneseq
          %v344 = vshrl.u32 %v343, 7
          %v345 = vsub.s32 0, %v344
          %v346 = vrot.slane %v341, %v345
          %v347 = vlaneseq
          %v348 = vshrl.u32 %v347, 7
          %v349 = vsub.s32 1, %v348
          %v350 = vrot.slane %v341, %v349
          %vm353 = vcmask 1040384
          %v354 = vsel %vm353, %v346, 0.0
          %v355 = vsel %vm353, %v350, 0.0
          %v356 = vadd.f32 %v354, %v355
          %357 = vadd.xlane.f32.xlu0 %v356
          %v358 = vpop.xlane.xlu0 %357
          %v359 = vrot.slane %v358, 4
          %v360 = vadd.f32 %v358, %v359
          %v361 = vrot.slane %v360, 2
          %v362 = vadd.f32 %v360, %v361
          %v363 = vrot.slane %v362, 1
          %v364 = vadd.f32 %v362, %v363
          %s365 = vtos %v364
          %v366 = vstv %s365
          %v367 = vsub.f32 %v340, %v366
          %v368 = vmax.f32 %v367, 0.0
          %v369 = vrsqrt.pop %v368
          %v370 = vmul.f32 %v368, %v369
          %vm371 = vcmp.eq.f32.partialorder %v368, inf
          %v372 = vsel %vm371, %v368, %v370
          %vm373 = vcmp.eq.f32.partialorder %v368, 0.0
          %v374 = vand.u32 %v368, 2147483648
          %v375 = vsel %vm373, %v374, %v372
          %vm376 = vcmask 0
          %377 = vst.msk [vmem:[%s181] sm:$0x1] %vm376, %v375
        $region40: #{orthogonality_forward.1} parent=27 // pred_fallthru
          _
        %p378 = scmp.lt.s32.totalorder %s18, 1
        %s379 = scalar_select %p378, %s18, 1
        %s380 = scalar_lea.vmem %s2, %s379
        // Predicated region
        $region41: #{orthogonality_forward.1} parent=27 // pred_check
          %p381 = pneg %p93
        $region42: #{orthogonality_forward.1} parent=27 // pred_check_branch
          %383 = sbr.rel (%p381) target = $region44
        $region43: #{orthogonality_forward.1} parent=27 // pred_region
          _
        $region44: #{orthogonality_forward.1} parent=27 // pred_fallthru
          _
      $region28: #{orthogonality_forward.1} parent=5 // pred_fallthru
        _
      %p384 = scmp.le.s32.totalorder 2, %s9
      // Predicated region
      $region45: #{orthogonality_forward.1} parent=5 // pred_check
        %p385 = pneg %p384
      $region46: #{orthogonality_forward.1} parent=5 // pred_check_branch
        %387 = sbr.rel (%p385) target = $region48
      $region47: #{orthogonality_forward.1} parent=5 // pred_region
        %s388 = ssub.s32 %s9, 2
        // Predicated region
        $region49: #{orthogonality_forward.1} parent=47 // pred_check
          %p389 = pneg %p99
        $region50: #{orthogonality_forward.1} parent=47 // pred_check_branch
          %391 = sbr.rel (%p389) target = $region52
        $region51: #{orthogonality_forward.1} parent=47 // pred_region
          %p392 = scmp.lt.s32.totalorder %s20, 1
          %s393 = scalar_select %p392, %s20, 1
          %s394 = scalar_lea.vmem %s2, %s393
        $region52: #{orthogonality_forward.1} parent=47 // pred_fallthru
          _
      $region48: #{orthogonality_forward.1} parent=5 // pred_fallthru
        _
    $region6: #{orthogonality_forward.1} parent=1 // loop_footer
      %s13 = sadd.s32 1, %s9
    $region7: #{orthogonality_forward.1} parent=1 // loop_footer_branch
      %8 = sbr.rel target = $region3
    $region8: #{orthogonality_forward.1} parent=1 // loop_exit
      _
    %395 = vsyncpa [#allocation5], 1
    %s396 = scalar_lea.sflag [#allocation5], 1
    %397 = vsyncpa %s396, 1

</llo_original>
